<compile_context>
chip_gen: v5e
topology: v5e:2x2
jax: 0.10.0
libtpu: 0.0.40
codegen_flags: <defaults>
</compile_context>

<pallas_src>
import functools

import jax
import jax.numpy as jnp
from jax.experimental import pallas as pl
from jax.experimental.pallas import tpu as pltpu

_PI      = 3.141592653589793
_PI_2    = 1.5707963267948966
_PI_4    = 0.7853981633974483
_TAN_PI8 = 0.4142135623730951


def _round_up(v, m):
    return ((v + m - 1) // m) * m


def _atan_0_1(t):
    """atan(t) for t in [0, 1] (Cephes atanf core, ~2e-7 max error)."""
    hi  = t > _TAN_PI8
    z   = jnp.where(hi, (t - 1.0) / (t + 1.0), t)
    off = jnp.where(hi, _PI_4, 0.0)
    w   = z * z
    p = ((8.05374449538e-2 * w - 1.38776856032e-1) * w
         + 1.99777106478e-1) * w - 3.33329491539e-1
    return off + (p * w * z + z)


def _atan2(y, x):
    """Elementwise atan2(y, x) from basic VPU ops; matches jnp.arctan2 to ~1e-6."""
    ay, ax = jnp.abs(y), jnp.abs(x)
    mx = jnp.maximum(ax, ay)
    mn = jnp.minimum(ax, ay)
    t  = mn / jnp.where(mx == 0.0, 1.0, mx)          # in [0, 1]; atan2(0, 0) -> 0
    a  = _atan_0_1(t)
    a  = jnp.where(ay > ax, _PI_2 - a, a)            # undo the |y| <= |x| reduction
    a  = jnp.where(x < 0.0, _PI - a, a)              # quadrants II / III
    return jnp.where(y < 0.0, -a, a)                 # lower half-plane


def polarnet_kernel(x_ref, w1_ref, b1_ref, w2_ref, b2_ref, out_ref, *, bf16_hidden):
    """One batch tile: x_ref (2, T) -> out_ref (1, T).  b2_ref is an SMEM scalar."""
    x0 = x_ref[0:1, :]                               # (1, T), lane-dense
    x1 = x_ref[1:2, :]

    # Polar transform (matches torch: r = sqrt(x0^2 + x1^2), a = atan2(x0, x1)).
    r = jnp.sqrt(x0 * x0 + x1 * x1)
    a = _atan2(x0, x1)

    # Linear1 (2 -> H) + tanh: K=2 contraction as two broadcast FMAs on the VPU.
    # w1 stays in PyTorch (out, in) layout, i.e. (H, 2); b1 is (H, 1).
    if bf16_hidden:
        # v6e/v7x fast path: bf16 FMAs + tanh on the dominant (H, T) intermediate.
        cdt = jnp.bfloat16
        h = jnp.tanh(w1_ref[:, 0:1].astype(cdt) * r.astype(cdt)
                     + w1_ref[:, 1:2].astype(cdt) * a.astype(cdt)
                     + b1_ref[...].astype(cdt)).astype(jnp.float32)
    else:
        h = jnp.tanh(w1_ref[:, 0:1] * r + w1_ref[:, 1:2] * a + b1_ref[...])   # (H, T)

    # Linear2 (H -> 1) + sigmoid: VPU multiply + sublane reduction in f32; result
    # stays lane-dense over the batch -> unmasked full-width stores.
    z = jnp.sum(h * w2_ref[...], axis=0, keepdims=True) + b2_ref[0]           # (1, T)
    out_ref[...] = jax.nn.sigmoid(z)


def _bf16_hidden_default():
    """bf16 hidden math only on bf16-native VPU/EUP generations (v6e / v7x)."""
    try:
        kind = jax.devices()[0].device_kind.lower()
    except Exception:
        return False
    return any(tag in kind for tag in ("v6", "v7", "7x"))


def _choose_tile(n, tile_m):
    """Batch tile: big enough to hide per-step overhead, >= 2 grid steps if possible."""
    if tile_m is None:
        base = 4096 if n >= 16384 else 2048
        tile_m = base if n > base else max(128, _round_up((n + 1) // 2, 128))
    return _round_up(int(tile_m), 128)


def polarnet_forward(x, params, *, tile_m=None, use_bf16_hidden=None, out_layout="col"):
    """PolarNet forward pass.

    x: (N, 2) PyTorch layout (transposed once in the wrapper) or (2, N) lane-major
       producer layout (consumed zero-copy -- preferred at scale).
    out_layout: "col" -> (N, 1) like the PyTorch module (bitcast reshape, cheap);
                "row" -> the kernel's native lane-major (1, N) slab, zero-copy.
    """
    w1, b1, w2, b2 = params                          # (H,2), (H,1), (H,1), (1,1)
    num_hid = w1.shape[0]

    # Pad hidden dim to a sublane multiple; zero rows contribute exactly 0.
    h_pad = max(8, _round_up(num_hid, 8))
    if h_pad != num_hid:
        pad = ((0, h_pad - num_hid), (0, 0))
        w1, b1, w2 = jnp.pad(w1, pad), jnp.pad(b1, pad), jnp.pad(w2, pad)
    w1 = w1.astype(jnp.float32)
    b1 = b1.astype(jnp.float32)
    w2 = w2.astype(jnp.float32)
    b2 = jnp.asarray(b2, jnp.float32).reshape(1)     # SMEM scalar

    # Input layout: prefer (2, N); transpose the PyTorch (N, 2) layout once.
    if x.ndim != 2:
        raise ValueError(f"expected a 2-D input, got shape {x.shape}")
    if x.shape[0] == 2 and x.shape[1] != 2:
        x_t = x                                      # lane-major producer layout: zero-copy
    elif x.shape[1] == 2:
        x_t = x.T                                    # one extra HBM pass; pass (2, N) to avoid
    else:
        raise ValueError(f"input must be (N, 2) or (2, N), got {x.shape}")
    x_t = x_t.astype(jnp.float32)
    n = x_t.shape[1]

    if use_bf16_hidden is None:
        use_bf16_hidden = _bf16_hidden_default()

    tile = _choose_tile(n, tile_m)
    grid = (pl.cdiv(n, tile),)                       # partial last block is fine

    cost = pl.CostEstimate(
        flops=int(n * (6 * h_pad + 30)),
        transcendentals=int(n * (h_pad + 3)),
        bytes_accessed=int(4 * (3 * n + 4 * h_pad + 1)),
    )

    kernel = functools.partial(polarnet_kernel, bf16_hidden=bool(use_bf16_hidden))

    out = pl.pallas_call(
        kernel,
        out_shape=jax.ShapeDtypeStruct((1, n), jnp.float32),
        grid=grid,
        in_specs=[
            pl.BlockSpec((2, tile), lambda i: (0, i)),            # x tile, auto-pipelined
            pl.BlockSpec((h_pad, 2), lambda i: (0, 0)),           # weights: VMEM-resident
            pl.BlockSpec((h_pad, 1), lambda i: (0, 0)),
            pl.BlockSpec((h_pad, 1), lambda i: (0, 0)),
            pl.BlockSpec(memory_space=pltpu.MemorySpace.SMEM),    # b2 scalar in SMEM
        ],
        out_specs=pl.BlockSpec((1, tile), lambda i: (0, i)),
        compiler_params=pltpu.CompilerParams(
            dimension_semantics=("parallel",),                    # megacore on v7x
            vmem_limit_bytes=32 * 1024 * 1024,
        ),
        cost_estimate=cost,
    )(x_t, w1, b1, w2, b2)

    if out_layout == "row":
        return out                                   # (1, N), no extra pass
    return out.reshape(n, 1)                         # (N, 1), PyTorch parity (bitcast)


def init_params(key, num_hid):
    """PyTorch nn.Linear default init: U(-1/sqrt(fan_in), +1/sqrt(fan_in))."""
    k1w, k1b, k2w, k2b = jax.random.split(key, 4)
    b1_bound = 1.0 / jnp.sqrt(2.0)
    b2_bound = 1.0 / jnp.sqrt(float(num_hid))
    w1 = jax.random.uniform(k1w, (num_hid, 2), jnp.float32, -b1_bound, b1_bound)
    b1 = jax.random.uniform(k1b, (num_hid, 1), jnp.float32, -b1_bound, b1_bound)
    w2 = jax.random.uniform(k2w, (num_hid, 1), jnp.float32, -b2_bound, b2_bound)
    b2 = jax.random.uniform(k2b, (1, 1), jnp.float32, -b2_bound, b2_bound)
    return w1, b1, w2, b2


def reference_forward(x, params):
    """Pure-JAX PolarNet reference (matches the PyTorch module)."""
    w1, b1, w2, b2 = params
    r = jnp.sqrt(x[:, 0] ** 2 + x[:, 1] ** 2)
    a = jnp.arctan2(x[:, 0], x[:, 1])
    pc = jnp.stack([r, a], axis=1)                   # (N, 2)
    h = jnp.tanh(pc @ w1.T + b1[:, 0])               # (N, H)
    z = h @ w2[:, 0] + b2[0, 0]                      # (N,)
    return jax.nn.sigmoid(z)[:, None]                # (N, 1)


if __name__ == "__main__":
    num_hid = 32
    batch = 1000        # spiral-dataset-sized; 2 grid steps, last block partial

    key = jax.random.PRNGKey(0)
    k_params, k_x = jax.random.split(key)
    params = init_params(k_params, num_hid)
    x = jax.random.normal(k_x, (batch, 2), dtype=jnp.float32)   # PyTorch (N, 2) layout

    ref = reference_forward(x, params)

    # 1) exact-parity f32 path (valid on every TPU generation)
    out = jax.block_until_ready(polarnet_forward(x, params, use_bf16_hidden=False))
    assert out.shape == (batch, 1)
    assert bool(jnp.all(jnp.isfinite(out)))
    err = float(jnp.max(jnp.abs(out - ref)))
    assert jnp.allclose(out, ref, atol=1e-5, rtol=1e-5), f"f32 mismatch vs reference: {err}"

    # 2) zero-copy lane-major input path ((2, N) producer layout) gives the same result
    out_t = jax.block_until_ready(polarnet_forward(x.T, params, use_bf16_hidden=False))
    assert jnp.allclose(out_t, out, atol=1e-6, rtol=1e-6), "layout paths disagree"

    # 3) generation-gated fast path (bf16 hidden math on v6e/v7x, f32 elsewhere)
    out_fast = jax.block_until_ready(polarnet_forward(x, params))
    assert out_fast.shape == (batch, 1)
    err_fast = float(jnp.max(jnp.abs(out_fast - ref)))
    assert jnp.allclose(out_fast, ref, atol=5e-2, rtol=0.0), f"fast-path mismatch: {err_fast}"

    print("KERNEL_OK")
</pallas_src>

<mosaic_0001>
module attributes {stable_mosaic.version = 11 : i64} {
  func.func @polarnet_kernel(%arg0: i32, %arg1: memref<2x512xf32, #tpu.memory_space<vmem>>, %arg2: memref<32x2xf32, #tpu.memory_space<vmem>>, %arg3: memref<32x1xf32, #tpu.memory_space<vmem>>, %arg4: memref<32x1xf32, #tpu.memory_space<vmem>>, %arg5: memref<1xf32, #tpu.memory_space<smem>>, %arg6: memref<1x512xf32, #tpu.memory_space<vmem>>) attributes {dimension_semantics = [#tpu.dimension_semantics<parallel>], iteration_bounds = array<i64: 2>, scalar_prefetch = 0 : i64, scratch_operands = 0 : i64, tpu.core_type = #tpu.core_type<tc>, window_params = [{transform_indices = @transform_0, window_bounds = array<i64: 2, 512>}, {pipeline_mode = #tpu.pipeline_mode<synchronous>, transform_indices = @transform_1, window_bounds = array<i64: 32, 2>}, {pipeline_mode = #tpu.pipeline_mode<synchronous>, transform_indices = @transform_2, window_bounds = array<i64: 32, 1>}, {pipeline_mode = #tpu.pipeline_mode<synchronous>, transform_indices = @transform_3, window_bounds = array<i64: 32, 1>}, {transform_indices = @transform_4, window_bounds = array<i64: 1>}, {transform_indices = @transform_5, window_bounds = array<i64: 1, 512>}]} {
    %c0 = arith.constant 0 : index
    %c0_0 = arith.constant 0 : index
    %0 = vector.load %arg1[%c0, %c0_0] : memref<2x512xf32, #tpu.memory_space<vmem>>, vector<1x512xf32>
    %c1 = arith.constant 1 : index
    %c0_1 = arith.constant 0 : index
    %1 = vector.load %arg1[%c1, %c0_1] : memref<2x512xf32, #tpu.memory_space<vmem>>, vector<1x512xf32>
    %2 = arith.mulf %0, %0 : vector<1x512xf32>
    %3 = arith.mulf %1, %1 : vector<1x512xf32>
    %4 = arith.addf %2, %3 : vector<1x512xf32>
    %5 = math.sqrt %4 : vector<1x512xf32>
    %6 = math.absf %0 : vector<1x512xf32>
    %7 = math.absf %1 : vector<1x512xf32>
    %8 = arith.maximumf %7, %6 : vector<1x512xf32>
    %9 = arith.minimumf %7, %6 : vector<1x512xf32>
    %cst = arith.constant 0.000000e+00 : f32
    %10 = vector.broadcast %cst : f32 to vector<1x512xf32>
    %11 = arith.cmpf oeq, %8, %10 : vector<1x512xf32>
    %cst_2 = arith.constant 1.000000e+00 : f32
    %12 = vector.broadcast %cst_2 : f32 to vector<1x512xf32>
    %13 = arith.select %11, %12, %8 : vector<1x512xi1>, vector<1x512xf32>
    %14 = arith.divf %9, %13 : vector<1x512xf32>
    %cst_3 = arith.constant 0.414213568 : f32
    %15 = vector.broadcast %cst_3 : f32 to vector<1x512xf32>
    %16 = arith.cmpf ogt, %14, %15 : vector<1x512xf32>
    %cst_4 = arith.constant 1.000000e+00 : f32
    %17 = vector.broadcast %cst_4 : f32 to vector<1x512xf32>
    %18 = arith.subf %14, %17 : vector<1x512xf32>
    %cst_5 = arith.constant 1.000000e+00 : f32
    %19 = vector.broadcast %cst_5 : f32 to vector<1x512xf32>
    %20 = arith.addf %14, %19 : vector<1x512xf32>
    %21 = arith.divf %18, %20 : vector<1x512xf32>
    %22 = arith.select %16, %21, %14 : vector<1x512xi1>, vector<1x512xf32>
    %cst_6 = arith.constant 0.785398185 : f32
    %cst_7 = arith.constant 0.000000e+00 : f32
    %23 = vector.broadcast %cst_6 : f32 to vector<1x512xf32>
    %24 = vector.broadcast %cst_7 : f32 to vector<1x512xf32>
    %25 = arith.select %16, %23, %24 : vector<1x512xi1>, vector<1x512xf32>
    %26 = arith.mulf %22, %22 : vector<1x512xf32>
    %cst_8 = arith.constant 0.0805374458 : f32
    %27 = vector.broadcast %cst_8 : f32 to vector<1x512xf32>
    %28 = arith.mulf %27, %26 : vector<1x512xf32>
    %cst_9 = arith.constant 0.138776854 : f32
    %29 = vector.broadcast %cst_9 : f32 to vector<1x512xf32>
    %30 = arith.subf %28, %29 : vector<1x512xf32>
    %31 = arith.mulf %30, %26 : vector<1x512xf32>
    %cst_10 = arith.constant 0.199777111 : f32
    %32 = vector.broadcast %cst_10 : f32 to vector<1x512xf32>
    %33 = arith.addf %31, %32 : vector<1x512xf32>
    %34 = arith.mulf %33, %26 : vector<1x512xf32>
    %cst_11 = arith.constant 0.333329499 : f32
    %35 = vector.broadcast %cst_11 : f32 to vector<1x512xf32>
    %36 = arith.subf %34, %35 : vector<1x512xf32>
    %37 = arith.mulf %36, %26 : vector<1x512xf32>
    %38 = arith.mulf %37, %22 : vector<1x512xf32>
    %39 = arith.addf %38, %22 : vector<1x512xf32>
    %40 = arith.addf %25, %39 : vector<1x512xf32>
    %41 = arith.cmpf ogt, %6, %7 : vector<1x512xf32>
    %cst_12 = arith.constant 1.57079637 : f32
    %42 = vector.broadcast %cst_12 : f32 to vector<1x512xf32>
    %43 = arith.subf %42, %40 : vector<1x512xf32>
    %44 = arith.select %41, %43, %40 : vector<1x512xi1>, vector<1x512xf32>
    %cst_13 = arith.constant 0.000000e+00 : f32
    %45 = vector.broadcast %cst_13 : f32 to vector<1x512xf32>
    %46 = arith.cmpf olt, %1, %45 : vector<1x512xf32>
    %cst_14 = arith.constant 3.14159274 : f32
    %47 = vector.broadcast %cst_14 : f32 to vector<1x512xf32>
    %48 = arith.subf %47, %44 : vector<1x512xf32>
    %49 = arith.select %46, %48, %44 : vector<1x512xi1>, vector<1x512xf32>
    %cst_15 = arith.constant 0.000000e+00 : f32
    %50 = vector.broadcast %cst_15 : f32 to vector<1x512xf32>
    %51 = arith.cmpf olt, %0, %50 : vector<1x512xf32>
    %cst_16 = arith.constant 0.000000e+00 : f32
    %52 = vector.broadcast %cst_16 : f32 to vector<1x512xf32>
    %53 = arith.subf %52, %49 : vector<1x512xf32>
    %54 = arith.select %51, %53, %49 : vector<1x512xi1>, vector<1x512xf32>
    %c0_17 = arith.constant 0 : index
    %c0_18 = arith.constant 0 : index
    %55 = vector.load %arg2[%c0_17, %c0_18] : memref<32x2xf32, #tpu.memory_space<vmem>>, vector<32x1xf32>
    %56 = vector.broadcast %55 : vector<32x1xf32> to vector<32x512xf32>
    %57 = vector.broadcast %5 : vector<1x512xf32> to vector<32x512xf32>
    %58 = arith.mulf %56, %57 : vector<32x512xf32>
    %c0_19 = arith.constant 0 : index
    %c1_20 = arith.constant 1 : index
    %59 = vector.load %arg2[%c0_19, %c1_20] : memref<32x2xf32, #tpu.memory_space<vmem>>, vector<32x1xf32>
    %60 = vector.broadcast %59 : vector<32x1xf32> to vector<32x512xf32>
    %61 = vector.broadcast %54 : vector<1x512xf32> to vector<32x512xf32>
    %62 = arith.mulf %60, %61 : vector<32x512xf32>
    %63 = arith.addf %58, %62 : vector<32x512xf32>
    %c0_21 = arith.constant 0 : index
    %c0_22 = arith.constant 0 : index
    %64 = vector.load %arg3[%c0_21, %c0_22] : memref<32x1xf32, #tpu.memory_space<vmem>>, vector<32x1xf32>
    %65 = vector.broadcast %64 : vector<32x1xf32> to vector<32x512xf32>
    %66 = arith.addf %63, %65 : vector<32x512xf32>
    %67 = math.tanh %66 : vector<32x512xf32>
    %c0_23 = arith.constant 0 : index
    %c0_24 = arith.constant 0 : index
    %68 = vector.load %arg4[%c0_23, %c0_24] : memref<32x1xf32, #tpu.memory_space<vmem>>, vector<32x1xf32>
    %69 = vector.broadcast %68 : vector<32x1xf32> to vector<32x512xf32>
    %70 = arith.mulf %67, %69 : vector<32x512xf32>
    %cst_25 = arith.constant dense<0.000000e+00> : vector<512xf32>
    %71 = vector.multi_reduction <add>, %70, %cst_25 [0] : vector<32x512xf32> to vector<512xf32>
    %72 = vector.shape_cast %71 : vector<512xf32> to vector<1x512xf32>
    %c0_26 = arith.constant 0 : index
    %73 = memref.load %arg5[%c0_26] : memref<1xf32, #tpu.memory_space<smem>>
    %74 = vector.broadcast %73 : f32 to vector<1x512xf32>
    %75 = arith.addf %72, %74 : vector<1x512xf32>
    %76 = arith.negf %75 : vector<1x512xf32>
    %77 = math.exp %76 : vector<1x512xf32>
    %cst_27 = arith.constant 1.000000e+00 : f32
    %78 = vector.broadcast %cst_27 : f32 to vector<1x512xf32>
    %79 = arith.addf %78, %77 : vector<1x512xf32>
    %80 = arith.divf %78, %79 : vector<1x512xf32>
    %c0_28 = arith.constant 0 : index
    %c0_29 = arith.constant 0 : index
    %81 = vector.load %arg6[%c0_28, %c0_29] : memref<1x512xf32, #tpu.memory_space<vmem>>, vector<1x512xf32>
    tpu.vector_store %arg6[%c0_28, %c0_29], %80 {strides = array<i32>} : memref<1x512xf32, #tpu.memory_space<vmem>>, vector<1x512xf32>,
    return
  }
  func.func @transform_0(%arg0: i32) -> (i32, i32) {
    %c0_i32 = arith.constant 0 : i32
    %c0_i32_0 = arith.constant 0 : i32
    return %c0_i32, %arg0 : i32, i32
  }
  func.func @transform_1(%arg0: i32) -> (i32, i32) {
    %c0_i32 = arith.constant 0 : i32
    %c0_i32_0 = arith.constant 0 : i32
    %c0_i32_1 = arith.constant 0 : i32
    return %c0_i32, %c0_i32_0 : i32, i32
  }
  func.func @transform_2(%arg0: i32) -> (i32, i32) {
    %c0_i32 = arith.constant 0 : i32
    %c0_i32_0 = arith.constant 0 : i32
    %c0_i32_1 = arith.constant 0 : i32
    return %c0_i32, %c0_i32_0 : i32, i32
  }
  func.func @transform_3(%arg0: i32) -> (i32, i32) {
    %c0_i32 = arith.constant 0 : i32
    %c0_i32_0 = arith.constant 0 : i32
    %c0_i32_1 = arith.constant 0 : i32
    return %c0_i32, %c0_i32_0 : i32, i32
  }
  func.func @transform_4(%arg0: i32) -> i32 {
    %c0_i32 = arith.constant 0 : i32
    %c0_i32_0 = arith.constant 0 : i32
    return %c0_i32 : i32
  }
  func.func @transform_5(%arg0: i32) -> (i32, i32) {
    %c0_i32 = arith.constant 0 : i32
    %c0_i32_0 = arith.constant 0 : i32
    return %c0_i32, %arg0 : i32, i32
  }
}

</mosaic_0001>

<llo_original>
// kernel: tpu_custom_call.1
$region0: #{tpu_custom_call.1}
  #allocation0 [shape = 'u32[]', space=smem, size = 0x4, offset = 0x4, fixed_abs, tag = 'smem constant byte address 0x4 - core index']
  #allocation1 [shape = 'u32[72,128]{1,0:T(1,128)}', space=vmem, size = 0x9000, scoped, tag = 'internal scratch']
  #allocation2 [shape = 'f32[1]{0:T(128)S(6)}', space=smem, size = 0x200, scoped, tag = 'scoped memory for tpu_custom_call.1']
  %s0 = inlined_call_operand.vmem [shape: f32[2,1000], index: 0, kind: input, shape index: {}]
  %s1 = inlined_call_operand.vmem [shape: f32[32,2], index: 1, kind: input, shape index: {}]
  %s2 = inlined_call_operand.vmem [shape: f32[32,1], index: 2, kind: input, shape index: {}]
  %s3 = inlined_call_operand.vmem [shape: f32[32,1], index: 3, kind: input, shape index: {}]
  %s4 = inlined_call_operand.<no memory space> [shape: f32[1], index: 4, kind: input, shape index: {}]
  %s5 = inlined_call_operand.hbm [shape: f32[1,1000], index: 5, kind: output, shape index: {}]
  %s6 = sld [smem:[#allocation0]]
  $region53: #{tpu_custom_call.1} parent=0
    _
  %s8 = ssub.s32 1, %s6
  %s9 = scalar_select 0, %s8, %s6
  %10 = sst [smem:[#allocation2]] %s4
  $region1: #{tpu_custom_call.1} parent=0
    #allocation3 [shape = 'u8[4096]{0}', space=vmem, size = 0x1000, scoped, tag = 'output window, operand 0']
    #allocation4 [shape = 's32[2]{0}', space=sflag, size = 0x8, scoped, tag = 'scoped memory for tpu_custom_call.1']
    %11 = vsyncpa [#allocation4], 0
    %s12 = scalar_lea.sflag [#allocation4], 1
    %13 = vsyncpa %s12, 0
    loop: start=0, step=1, limit=4
    $region2: #{tpu_custom_call.1} parent=1 // loop_pre_header
      _
    $region3: #{tpu_custom_call.1} parent=1 // loop_header
      %s15 = sphi 0, %s19
      %p16 = scmp.ge.s32.totalorder %s15, 4
      %s25 = sphi 0, %s27
      %s28 = sphi 0, %s25
      %s29 = sphi 0, %s28
      %s45 = sphi 0, %s29
      %s49 = sphi 0, %s49
      %s51 = sphi 0, %s49
      %s52 = sphi 0, %s51
      %s66 = sphi 0, %s52
      %s70 = sphi 0, %s70
      %s72 = sphi 0, %s70
      %s73 = sphi 0, %s72
      %s87 = sphi 0, %s73
      %s91 = sphi 0, %s91
      %s93 = sphi 0, %s91
      %s94 = sphi 0, %s93
      %s108 = sphi 0, %s94
      %s112 = sphi 0, %s112
      %s114 = sphi 0, %s112
      %s115 = sphi 0, %s114
      %s129 = sphi 0, %s115
      %s135 = sphi 0, %s137
      %s138 = sphi 0, %s135
      %s139 = sphi 0, %s138
      %s155 = sphi 0, %s139
    $region4: #{tpu_custom_call.1} parent=1 // loop_header_branch
      %18 = sbr.rel (%p16) target = $region8
    $region5: #{tpu_custom_call.1} parent=1 // loop_body
      %s20 = ssub.s32 %s15, 1
      %s21 = ssub.s32 %s15, 2
      %s22 = sadd.s32 %s15, 1
      %s23 = ssub.s32 %s15, %s22
      %p24 = scmp.eq.s32.totalorder %s23, 0
      %s26 = sadd.s32 %s25, 1
      %s27 = scalar_select %p24, %s25, %s26
      %p30 = pneg %p24
      %p31 = scmp.eq.s32.totalorder %s15, 1
      %p32 = por %p30, %p31
      %p33 = scmp.ne.s32.totalorder %s25, %s28
      %p34 = scmp.eq.s32.totalorder %s15, 0
      %p35 = por %p33, %p34
      %p36 = scmp.ne.s32.totalorder %s25, %s28
      %p37 = scmp.eq.s32.totalorder %s20, 1
      %p38 = por %p36, %p37
      %p39 = scmp.ne.s32.totalorder %s28, %s29
      %p40 = scmp.eq.s32.totalorder %s20, 0
      %p41 = por %p39, %p40
      %p42 = scmp.ne.s32.totalorder %s28, %s29
      %p43 = scmp.eq.s32.totalorder %s21, 1
      %p44 = por %p42, %p43
      %p46 = scmp.ne.s32.totalorder %s29, %s45
      %p47 = scmp.eq.s32.totalorder %s21, 0
      %p48 = por %p46, %p47
      %s50 = sadd.s32 %s49, 1
      %p53 = scmp.eq.s32.totalorder %s15, 1
      %p54 = scmp.ne.s32.totalorder %s49, %s51
      %p55 = scmp.eq.s32.totalorder %s15, 0
      %p56 = por %p54, %p55
      %p57 = scmp.ne.s32.totalorder %s49, %s51
      %p58 = scmp.eq.s32.totalorder %s20, 1
      %p59 = por %p57, %p58
      %p60 = scmp.ne.s32.totalorder %s51, %s52
      %p61 = scmp.eq.s32.totalorder %s20, 0
      %p62 = por %p60, %p61
      %p63 = scmp.ne.s32.totalorder %s51, %s52
      %p64 = scmp.eq.s32.totalorder %s21, 1
      %p65 = por %p63, %p64
      %p67 = scmp.ne.s32.totalorder %s52, %s66
      %p68 = scmp.eq.s32.totalorder %s21, 0
      %p69 = por %p67, %p68
      %s71 = sadd.s32 %s70, 1
      %p74 = scmp.eq.s32.totalorder %s15, 1
      %p75 = scmp.ne.s32.totalorder %s70, %s72
      %p76 = scmp.eq.s32.totalorder %s15, 0
      %p77 = por %p75, %p76
      %p78 = scmp.ne.s32.totalorder %s70, %s72
      %p79 = scmp.eq.s32.totalorder %s20, 1
      %p80 = por %p78, %p79
      %p81 = scmp.ne.s32.totalorder %s72, %s73
      %p82 = scmp.eq.s32.totalorder %s20, 0
      %p83 = por %p81, %p82
      %p84 = scmp.ne.s32.totalorder %s72, %s73
      %p85 = scmp.eq.s32.totalorder %s21, 1
      %p86 = por %p84, %p85
      %p88 = scmp.ne.s32.totalorder %s73, %s87
      %p89 = scmp.eq.s32.totalorder %s21, 0
      %p90 = por %p88, %p89
      %s92 = sadd.s32 %s91, 1
      %p95 = scmp.eq.s32.totalorder %s15, 1
      %p96 = scmp.ne.s32.totalorder %s91, %s93
      %p97 = scmp.eq.s32.totalorder %s15, 0
      %p98 = por %p96, %p97
      %p99 = scmp.ne.s32.totalorder %s91, %s93
      %p100 = scmp.eq.s32.totalorder %s20, 1
      %p101 = por %p99, %p100
      %p102 = scmp.ne.s32.totalorder %s93, %s94
      %p103 = scmp.eq.s32.totalorder %s20, 0
      %p104 = por %p102, %p103
      %p105 = scmp.ne.s32.totalorder %s93, %s94
      %p106 = scmp.eq.s32.totalorder %s21, 1
      %p107 = por %p105, %p106
      %p109 = scmp.ne.s32.totalorder %s94, %s108
      %p110 = scmp.eq.s32.totalorder %s21, 0
      %p111 = por %p109, %p110
      %s113 = sadd.s32 %s112, 1
      %p116 = scmp.eq.s32.totalorder %s15, 1
      %p117 = scmp.ne.s32.totalorder %s112, %s114
      %p118 = scmp.eq.s32.totalorder %s15, 0
      %p119 = por %p117, %p118
      %p120 = scmp.ne.s32.totalorder %s112, %s114
      %p121 = scmp.eq.s32.totalorder %s20, 1
      %p122 = por %p120, %p121
      %p123 = scmp.ne.s32.totalorder %s114, %s115
      %p124 = scmp.eq.s32.totalorder %s20, 0
      %p125 = por %p123, %p124
      %p126 = scmp.ne.s32.totalorder %s114, %s115
      %p127 = scmp.eq.s32.totalorder %s21, 1
      %p128 = por %p126, %p127
      %p130 = scmp.ne.s32.totalorder %s115, %s129
      %p131 = scmp.eq.s32.totalorder %s21, 0
      %p132 = por %p130, %p131
      %s133 = ssub.s32 %s15, %s22
      %p134 = scmp.eq.s32.totalorder %s133, 0
      %s136 = sadd.s32 %s135, 1
      %s137 = scalar_select %p134, %s135, %s136
      %p140 = pneg %p134
      %p141 = scmp.eq.s32.totalorder %s15, 1
      %p142 = por %p140, %p141
      %p143 = scmp.ne.s32.totalorder %s135, %s138
      %p144 = scmp.eq.s32.totalorder %s15, 0
      %p145 = por %p143, %p144
      %p146 = scmp.ne.s32.totalorder %s135, %s138
      %p147 = scmp.eq.s32.totalorder %s20, 1
      %p148 = por %p146, %p147
      %p149 = scmp.ne.s32.totalorder %s138, %s139
      %p150 = scmp.eq.s32.totalorder %s20, 0
      %p151 = por %p149, %p150
      %p152 = scmp.ne.s32.totalorder %s138, %s139
      %p153 = scmp.eq.s32.totalorder %s21, 1
      %p154 = por %p152, %p153
      %p156 = scmp.ne.s32.totalorder %s139, %s155
      %p157 = scmp.eq.s32.totalorder %s21, 0
      %p158 = por %p156, %p157
      %p159 = scmp.le.s32.totalorder 1, %s15
      %p160 = scmp.lt.s32.totalorder %s15, 3
      %p161 = pnand %p159, %p160
      %p162 = pneg %p161
      // Predicated region
      $region9: #{tpu_custom_call.1} parent=5 // pred_check
        _
      $region10: #{tpu_custom_call.1} parent=5 // pred_check_branch
        %164 = sbr.rel (%p161) target = $region12
      $region11: #{tpu_custom_call.1} parent=5 // pred_region
        %s165 = ssub.s32 %s15, 1
        // Predicated region
        $region13: #{tpu_custom_call.1} parent=11 // pred_check
          %p166 = pneg %p62
        $region14: #{tpu_custom_call.1} parent=11 // pred_check_branch
          %168 = sbr.rel (%p166) target = $region16
        $region15: #{tpu_custom_call.1} parent=11 // pred_region
          _
        $region16: #{tpu_custom_call.1} parent=11 // pred_fallthru
          _
        // Predicated region
        $region17: #{tpu_custom_call.1} parent=11 // pred_check
          %p169 = pneg %p83
        $region18: #{tpu_custom_call.1} parent=11 // pred_check_branch
          %171 = sbr.rel (%p169) target = $region20
        $region19: #{tpu_custom_call.1} parent=11 // pred_region
          _
        $region20: #{tpu_custom_call.1} parent=11 // pred_fallthru
          _
        // Predicated region
        $region21: #{tpu_custom_call.1} parent=11 // pred_check
          %p172 = pneg %p104
        $region22: #{tpu_custom_call.1} parent=11 // pred_check_branch
          %174 = sbr.rel (%p172) target = $region24
        $region23: #{tpu_custom_call.1} parent=11 // pred_region
          _
        $region24: #{tpu_custom_call.1} parent=11 // pred_fallthru
          _
        // Predicated region
        $region25: #{tpu_custom_call.1} parent=11 // pred_check
          %p175 = pneg %p125
        $region26: #{tpu_custom_call.1} parent=11 // pred_check_branch
          %177 = sbr.rel (%p175) target = $region28
        $region27: #{tpu_custom_call.1} parent=11 // pred_region
          _
        $region28: #{tpu_custom_call.1} parent=11 // pred_fallthru
          _
      $region12: #{tpu_custom_call.1} parent=5 // pred_fallthru
        _
      %p178 = scmp.lt.s32.totalorder %s15, 2
      // Predicated region
      $region29: #{tpu_custom_call.1} parent=5 // pred_check
        %p179 = pneg %p178
      $region30: #{tpu_custom_call.1} parent=5 // pred_check_branch
        %181 = sbr.rel (%p179) target = $region32
      $region31: #{tpu_custom_call.1} parent=5 // pred_region
        // Predicated region
        $region33: #{tpu_custom_call.1} parent=31 // pred_check
          %p182 = pneg %p35
        $region34: #{tpu_custom_call.1} parent=31 // pred_check_branch
          %184 = sbr.rel (%p182) target = $region36
        $region35: #{tpu_custom_call.1} parent=31 // pred_region
          %s185 = smul.u32 4, %s15
          %p186 = scmp.lt.s32.totalorder %s185, 7
          %s187 = scalar_select %p186, %s185, 7
          %s188 = smul.addr %s187, 2
          %s189 = scalar_lea.vmem %s0, %s188
          %s190 = smul.u32 4, %s15
        $region36: #{tpu_custom_call.1} parent=31 // pred_fallthru
          _
      $region32: #{tpu_custom_call.1} parent=5 // pred_fallthru
        _
      %p191 = scmp.le.s32.totalorder 1, %s15
      %p192 = scmp.lt.s32.totalorder %s15, 3
      %p193 = pnand %p191, %p192
      %p194 = pneg %p193
      // Predicated region
      $region37: #{tpu_custom_call.1} parent=5 // pred_check
        _
      $region38: #{tpu_custom_call.1} parent=5 // pred_check_branch
        %196 = sbr.rel (%p193) target = $region40
      $region39: #{tpu_custom_call.1} parent=5 // pred_region
        %s197 = ssub.s32 %s15, 1
        %s198 = smul.u32 4, %s20
        %p199 = scmp.lt.s32.totalorder %s198, 7
        %s200 = scalar_select %p199, %s198, 7
        %s201 = smul.addr %s200, 2
        %s202 = scalar_lea.vmem %s0, %s201
        %p203 = pneg %p41
        %p204 = pneg %p38
        %p205 = pneg %p62
        %p206 = pneg %p59
        %p207 = pneg %p83
        %p208 = pneg %p80
        %p209 = pneg %p104
        %p210 = pneg %p101
        %p211 = pneg %p125
        %p212 = pneg %p122
        %p213 = pneg %p151
        %p214 = pneg %p148
        %s215 = sand.u32 %s138, 1
        %s216 = scalar_lea.sflag [#allocation4], %s215
        %s217 = sand.u32 %s138, 1
        %s218 = smul.addr %s217, 4
        %s219 = scalar_lea.vmem [#allocation3], %s218
        %s220 = smul.u32 4, %s20
        %p221 = scmp.lt.s32.totalorder %s220, 7
        %s222 = scalar_select %p221, %s220, 7
        %s223 = smul.addr %s222, 2
        %s224 = scalar_lea.vmem %s0, %s223
        %s225 = smul.u32 4, %s20
        %s226 = smul.u32 4, %s20
        %v227 = vld [vmem:[%s224] ss:$2 sm:$0xf]
        %s228 = scalar_lea.vmem %s224, 1
        %v229 = vld [vmem:[%s228] ss:$2 sm:$0xf]
        %v230 = vmul.f32 %v227, %v227
        %v231 = vmul.f32 %v229, %v229
        %v232 = vadd.f32 %v230, %v231
        %v233 = vrsqrt.pop %v232
        %v234 = vmul.f32 %v233, %v232
        %v235 = vmul.f32 %v234, %v233
        %v236 = vmul.f32 0.5, %v235
        %v237 = vsub.f32 1.5, %v236
        %v238 = vmul.f32 %v233, %v237
        %v239 = vmul.f32 %v232, %v238
        %vm240 = vcmp.eq.f32.partialorder %v232, inf
        %v241 = vsel %vm240, %v232, %v239
        %vm242 = vcmp.eq.f32.partialorder %v232, 0.0
        %v243 = vand.u32 %v232, 2147483648
        %v244 = vsel %vm242, %v243, %v241
        %v245 = vand.u32 2147483647, %v227
        %v246 = vand.u32 2147483647, %v229
        %v247 = vmax.f32 %v246, %v245
        %v248 = vmin.f32 %v246, %v245
        %vm249 = vcmp.eq.f32.partialorder %v247, 0.0
        %v250 = vsel %vm249, 1.0, %v247
        %v251 = vrcp.pop %v250
        %v252 = vmul.f32 %v250, %v251
        %v253 = vsub.f32 1.0, %v252
        %v254 = vmul.f32 %v251, %v253
        %v255 = vadd.f32 %v251, %v254
        %vm256 = vweird.f32 %v250
        %vm257 = vweird.f32 %v251
        %vm258 = vmor %vm256, %vm257
        %v259 = vsel %vm258, %v251, %v255
        %v260 = vand.u32 2147483647, %v250
        %vm261 = vcmp.eq.f32.partialorder %v260, 8.507059e+37
        %v262 = vand.u32 %v250, 2147483648
        %v263 = vor.u32 1.1754944e-38, %v262
        %v264 = vsel %vm261, %v263, %v259
        %v265 = vmul.f32 %v248, %v264
        %vm266 = vcmp.gt.f32.partialorder %v265, 0.41421357
        %v267 = vsub.f32 %v265, 1.0
        %v268 = vadd.f32 %v265, 1.0
        %v269 = vrcp.pop %v268
        %v270 = vmul.f32 %v268, %v269
        %v271 = vsub.f32 1.0, %v270
        %v272 = vmul.f32 %v269, %v271
        %v273 = vadd.f32 %v269, %v272
        %vm274 = vweird.f32 %v268
        %vm275 = vweird.f32 %v269
        %vm276 = vmor %vm274, %vm275
        %v277 = vsel %vm276, %v269, %v273
        %v278 = vand.u32 2147483647, %v268
        %vm279 = vcmp.eq.f32.partialorder %v278, 8.507059e+37
        %v280 = vand.u32 %v268, 2147483648
        %v281 = vor.u32 1.1754944e-38, %v280
        %v282 = vsel %vm279, %v281, %v277
        %v283 = vmul.f32 %v267, %v282
        %v284 = vsel %vm266, %v283, %v265
        %v285 = vsel %vm266, 0.7853982, 0.0
        %v286 = vmul.f32 %v284, %v284
        %v287 = vmul.f32 %v286, 0.080537446
        %v288 = vsub.f32 %v287, 0.13877685
        %v289 = vmul.f32 %v288, %v286
        %v290 = vadd.f32 %v289, 0.19977711
        %v291 = vmul.f32 %v290, %v286
        %v292 = vsub.f32 %v291, 0.3333295
        %v293 = vmul.f32 %v292, %v286
        %v294 = vmul.f32 %v293, %v284
        %v295 = vadd.f32 %v294, %v284
        %v296 = vadd.f32 %v285, %v295
        %vm297 = vcmp.gt.f32.partialorder %v245, %v246
        %v298 = vsub.f32 1.5707964, %v296
        %v299 = vsel %vm297, %v298, %v296
        %vm300 = vcmp.lt.f32.partialorder %v229, 0.0
        %v301 = vsub.f32 3.1415927, %v299
        %v302 = vsel %vm300, %v301, %v299
        %vm303 = vcmp.lt.f32.partialorder %v227, 0.0
        %v304 = vsub.f32 0.0, %v302
        %v305 = vsel %vm303, %v304, %v302
        %v306 = vld [vmem:[%s1] sm:$0xff]
        %v307 = vld [vmem:[%s1 + $0x8] sm:$0xff]
        %v308 = vld [vmem:[%s1 + $0x10] sm:$0xff]
        %v309 = vld [vmem:[%s1 + $0x18] sm:$0xff]
        %311 = vset.pattern.permute.xlu0 0
        %312 = vperm.xlu0 %311, %v306
        %v313 = vpop.permute.xlu0 %312
        %316 = vset.pattern.permute.xlu0 0
        %317 = vperm.xlu0 %316, %v307
        %v318 = vpop.permute.xlu0 %317
        %321 = vset.pattern.permute.xlu0 0
        %322 = vperm.xlu0 %321, %v308
        %v323 = vpop.permute.xlu0 %322
        %326 = vset.pattern.permute.xlu0 0
        %327 = vperm.xlu0 %326, %v309
        %v328 = vpop.permute.xlu0 %327
        %v331 = vperm.slane %v244, 0
        %v332 = vperm.slane %v244, 1
        %v333 = vperm.slane %v244, 2
        %v334 = vperm.slane %v244, 3
        %v339 = vmul.f32 %v313, %v331
        %v340 = vmul.f32 %v313, %v332
        %v341 = vmul.f32 %v313, %v333
        %v342 = vmul.f32 %v313, %v334
        %v343 = vmul.f32 %v318, %v331
        %v344 = vmul.f32 %v318, %v332
        %v345 = vmul.f32 %v318, %v333
        %v346 = vmul.f32 %v318, %v334
        %v347 = vmul.f32 %v323, %v331
        %v348 = vmul.f32 %v323, %v332
        %v349 = vmul.f32 %v323, %v333
        %v350 = vmul.f32 %v323, %v334
        %v351 = vmul.f32 %v328, %v331
        %v352 = vmul.f32 %v328, %v332
        %v353 = vmul.f32 %v328, %v333
        %v354 = vmul.f32 %v328, %v334
        %355 = vset.pattern.permute.xlu0 1
        %356 = vperm.xlu0 %355, %v306
        %v357 = vpop.permute.xlu0 %356
        %359 = vset.pattern.permute.xlu0 1
        %360 = vperm.xlu0 %359, %v307
        %v361 = vpop.permute.xlu0 %360
        %363 = vset.pattern.permute.xlu0 1
        %364 = vperm.xlu0 %363, %v308
        %v365 = vpop.permute.xlu0 %364
        %367 = vset.pattern.permute.xlu0 1
        %368 = vperm.xlu0 %367, %v309
        %v369 = vpop.permute.xlu0 %368
        %v372 = vperm.slane %v305, 0
        %v373 = vperm.slane %v305, 1
        %v374 = vperm.slane %v305, 2
        %v375 = vperm.slane %v305, 3
        %v380 = vmul.f32 %v357, %v372
        %v381 = vmul.f32 %v357, %v373
        %v382 = vmul.f32 %v357, %v374
        %v383 = vmul.f32 %v357, %v375
        %v384 = vmul.f32 %v361, %v372
        %v385 = vmul.f32 %v361, %v373
        %v386 = vmul.f32 %v361, %v374
        %v387 = vmul.f32 %v361, %v375
        %v388 = vmul.f32 %v365, %v372
        %v389 = vmul.f32 %v365, %v373
        %v390 = vmul.f32 %v365, %v374
        %v391 = vmul.f32 %v365, %v375
        %v392 = vmul.f32 %v369, %v372
        %v393 = vmul.f32 %v369, %v373
        %v394 = vmul.f32 %v369, %v374
        %v395 = vmul.f32 %v369, %v375
        %v396 = vadd.f32 %v339, %v380
        %v397 = vadd.f32 %v340, %v381
        %v398 = vadd.f32 %v341, %v382
        %v399 = vadd.f32 %v342, %v383
        %v400 = vadd.f32 %v343, %v384
        %v401 = vadd.f32 %v344, %v385
        %v402 = vadd.f32 %v345, %v386
        %v403 = vadd.f32 %v346, %v387
        %v404 = vadd.f32 %v347, %v388
        %v405 = vadd.f32 %v348, %v389
        %v406 = vadd.f32 %v349, %v390
        %v407 = vadd.f32 %v350, %v391
        %v408 = vadd.f32 %v351, %v392
        %v409 = vadd.f32 %v352, %v393
        %v410 = vadd.f32 %v353, %v394
        %v411 = vadd.f32 %v354, %v395
        %v412 = vld [vmem:[%s2] sm:$0xff]
        %v413 = vld [vmem:[%s2 + $0x8] sm:$0xff]
        %v414 = vld [vmem:[%s2 + $0x10] sm:$0xff]
        %v415 = vld [vmem:[%s2 + $0x18] sm:$0xff]
        %417 = vset.pattern.permute.xlu0 0
        %418 = vperm.xlu0 %417, %v412
        %v419 = vpop.permute.xlu0 %418
        %422 = vset.pattern.permute.xlu0 0
        %423 = vperm.xlu0 %422, %v413
        %v424 = vpop.permute.xlu0 %423
        %427 = vset.pattern.permute.xlu0 0
        %428 = vperm.xlu0 %427, %v414
        %v429 = vpop.permute.xlu0 %428
        %432 = vset.pattern.permute.xlu0 0
        %433 = vperm.xlu0 %432, %v415
        %v434 = vpop.permute.xlu0 %433
        %v436 = vadd.f32 %v396, %v419
        %v437 = vadd.f32 %v397, %v419
        %v438 = vadd.f32 %v398, %v419
        %v439 = vadd.f32 %v399, %v419
        %v440 = vadd.f32 %v400, %v424
        %v441 = vadd.f32 %v401, %v424
        %v442 = vadd.f32 %v402, %v424
        %v443 = vadd.f32 %v403, %v424
        %v444 = vadd.f32 %v404, %v429
        %v445 = vadd.f32 %v405, %v429
        %v446 = vadd.f32 %v406, %v429
        %v447 = vadd.f32 %v407, %v429
        %v448 = vadd.f32 %v408, %v434
        %v449 = vadd.f32 %v409, %v434
        %v450 = vadd.f32 %v410, %v434
        %v451 = vadd.f32 %v411, %v434
        %v452 = vtanh.pop %v436
        %v453 = vtanh.pop %v437
        %v454 = vtanh.pop %v438
        %v455 = vtanh.pop %v439
        %v456 = vtanh.pop %v440
        %v457 = vtanh.pop %v441
        %v458 = vtanh.pop %v442
        %v459 = vtanh.pop %v443
        %v460 = vtanh.pop %v444
        %v461 = vtanh.pop %v445
        %v462 = vtanh.pop %v446
        %v463 = vtanh.pop %v447
        %v464 = vtanh.pop %v448
        %v465 = vtanh.pop %v449
        %v466 = vtanh.pop %v450
        %v467 = vtanh.pop %v451
        %v468 = vld [vmem:[%s3] sm:$0xff]
        %v469 = vld [vmem:[%s3 + $0x8] sm:$0xff]
        %v470 = vld [vmem:[%s3 + $0x10] sm:$0xff]
        %v471 = vld [vmem:[%s3 + $0x18] sm:$0xff]
        %473 = vset.pattern.permute.xlu0 0
        %474 = vperm.xlu0 %473, %v468
        %v475 = vpop.permute.xlu0 %474
        %478 = vset.pattern.permute.xlu0 0
        %479 = vperm.xlu0 %478, %v469
        %v480 = vpop.permute.xlu0 %479
        %483 = vset.pattern.permute.xlu0 0
        %484 = vperm.xlu0 %483, %v470
        %v485 = vpop.permute.xlu0 %484
        %488 = vset.pattern.permute.xlu0 0
        %489 = vperm.xlu0 %488, %v471
        %v490 = vpop.permute.xlu0 %489
        %v492 = vmul.f32 %v452, %v475
        %v493 = vmul.f32 %v453, %v475
        %v494 = vmul.f32 %v454, %v475
        %v495 = vmul.f32 %v455, %v475
        %v496 = vmul.f32 %v456, %v480
        %v497 = vmul.f32 %v457, %v480
        %v498 = vmul.f32 %v458, %v480
        %v499 = vmul.f32 %v459, %v480
        %v500 = vmul.f32 %v460, %v485
        %v501 = vmul.f32 %v461, %v485
        %v502 = vmul.f32 %v462, %v485
        %v503 = vmul.f32 %v463, %v485
        %v504 = vmul.f32 %v464, %v490
        %v505 = vmul.f32 %v465, %v490
        %v506 = vmul.f32 %v466, %v490
        %v507 = vmul.f32 %v467, %v490
        %v508 = vadd.f32 %v492, %v496
        %v509 = vadd.f32 %v508, %v500
        %v510 = vadd.f32 %v509, %v504
        %v511 = vrot.slane %v510, 4
        %v512 = vadd.f32 %v510, %v511
        %v513 = vrot.slane %v512, 2
        %v514 = vadd.f32 %v512, %v513
        %v515 = vrot.slane %v514, 1
        %v516 = vadd.f32 %v514, %v515
        %v517 = vadd.f32 %v493, %v497
        %v518 = vadd.f32 %v517, %v501
        %v519 = vadd.f32 %v518, %v505
        %v520 = vrot.slane %v519, 4
        %v521 = vadd.f32 %v519, %v520
        %v522 = vrot.slane %v521, 2
        %v523 = vadd.f32 %v521, %v522
        %v524 = vrot.slane %v523, 1
        %v525 = vadd.f32 %v523, %v524
        %v526 = vadd.f32 %v494, %v498
        %v527 = vadd.f32 %v526, %v502
        %v528 = vadd.f32 %v527, %v506
        %v529 = vrot.slane %v528, 4
        %v530 = vadd.f32 %v528, %v529
        %v531 = vrot.slane %v530, 2
        %v532 = vadd.f32 %v530, %v531
        %v533 = vrot.slane %v532, 1
        %v534 = vadd.f32 %v532, %v533
        %v535 = vadd.f32 %v495, %v499
        %v536 = vadd.f32 %v535, %v503
        %v537 = vadd.f32 %v536, %v507
        %v538 = vrot.slane %v537, 4
        %v539 = vadd.f32 %v537, %v538
        %v540 = vrot.slane %v539, 2
        %v541 = vadd.f32 %v539, %v540
        %v542 = vrot.slane %v541, 1
        %v543 = vadd.f32 %v541, %v542
        %s544 = sld [smem:[#allocation2]]
        %v545 = vstv %s544
        %v546 = vadd.f32 %v516, %v545
        %v547 = vadd.f32 %v525, %v545
        %v548 = vadd.f32 %v534, %v545
        %v549 = vadd.f32 %v543, %v545
        %v550 = vxor.u32 %v546, 2147483648
        %v551 = vxor.u32 %v547, 2147483648
        %v552 = vxor.u32 %v548, 2147483648
        %v553 = vxor.u32 %v549, 2147483648
        %v554 = vmul.f32 %v550, 1.442695
        %v555 = vpow.pop %v554
        %v556 = vmul.f32 %v551, 1.442695
        %v557 = vpow.pop %v556
        %v558 = vmul.f32 %v552, 1.442695
        %v559 = vpow.pop %v558
        %v560 = vmul.f32 %v553, 1.442695
        %v561 = vpow.pop %v560
        %v562 = vadd.f32 %v555, 1.0
        %v563 = vadd.f32 %v557, 1.0
        %v564 = vadd.f32 %v559, 1.0
        %v565 = vadd.f32 %v561, 1.0
        %v566 = vrcp.pop %v562
        %v567 = vmul.f32 %v562, %v566
        %v568 = vsub.f32 1.0, %v567
        %v569 = vmul.f32 %v566, %v568
        %v570 = vadd.f32 %v566, %v569
        %vm571 = vweird.f32 %v562
        %vm572 = vweird.f32 %v566
        %vm573 = vmor %vm571, %vm572
        %v574 = vsel %vm573, %v566, %v570
        %v575 = vand.u32 2147483647, %v562
        %vm576 = vcmp.eq.f32.partialorder %v575, 8.507059e+37
        %v577 = vand.u32 %v562, 2147483648
        %v578 = vor.u32 1.1754944e-38, %v577
        %v579 = vsel %vm576, %v578, %v574
        %v580 = vmul.f32 1.0, %v579
        %v581 = vrcp.pop %v563
        %v582 = vmul.f32 %v563, %v581
        %v583 = vsub.f32 1.0, %v582
        %v584 = vmul.f32 %v581, %v583
        %v585 = vadd.f32 %v581, %v584
        %vm586 = vweird.f32 %v563
        %vm587 = vweird.f32 %v581
        %vm588 = vmor %vm586, %vm587
        %v589 = vsel %vm588, %v581, %v585
        %v590 = vand.u32 2147483647, %v563
        %vm591 = vcmp.eq.f32.partialorder %v590, 8.507059e+37
        %v592 = vand.u32 %v563, 2147483648
        %v593 = vor.u32 1.1754944e-38, %v592
        %v594 = vsel %vm591, %v593, %v589
        %v595 = vmul.f32 1.0, %v594
        %v596 = vrcp.pop %v564
        %v597 = vmul.f32 %v564, %v596
        %v598 = vsub.f32 1.0, %v597
        %v599 = vmul.f32 %v596, %v598
        %v600 = vadd.f32 %v596, %v599
        %vm601 = vweird.f32 %v564
        %vm602 = vweird.f32 %v596
        %vm603 = vmor %vm601, %vm602
        %v604 = vsel %vm603, %v596, %v600
        %v605 = vand.u32 2147483647, %v564
        %vm606 = vcmp.eq.f32.partialorder %v605, 8.507059e+37
        %v607 = vand.u32 %v564, 2147483648
        %v608 = vor.u32 1.1754944e-38, %v607
        %v609 = vsel %vm606, %v608, %v604
        %v610 = vmul.f32 1.0, %v609
        %v611 = vrcp.pop %v565
        %v612 = vmul.f32 %v565, %v611
        %v613 = vsub.f32 1.0, %v612
        %v614 = vmul.f32 %v611, %v613
        %v615 = vadd.f32 %v611, %v614
        %vm616 = vweird.f32 %v565
        %vm617 = vweird.f32 %v611
        %vm618 = vmor %vm616, %vm617
        %v619 = vsel %vm618, %v611, %v615
        %v620 = vand.u32 2147483647, %v565
        %vm621 = vcmp.eq.f32.partialorder %v620, 8.507059e+37
        %v622 = vand.u32 %v565, 2147483648
        %v623 = vor.u32 1.1754944e-38, %v622
        %v624 = vsel %vm621, %v623, %v619
        %v625 = vmul.f32 1.0, %v624
        %v630 = vrot.slane %v595, 7
        %v631 = vrot.slane %v610, 6
        %v632 = vrot.slane %v625, 5
        %vm633 = vcmask 1040384
        %v634 = vsel %vm633, %v580, %v630
        %vm635 = vcmask 1042434
        %v636 = vsel %vm635, %v631, %v632
        %vm637 = vcmask 1041408
        %v638 = vsel %vm637, %v634, %v636
        %v640 = vlaneseq
        %vm641 = vcmp.ge.s32.totalorder %v640, 0
        %vm642 = vcmp.lt.s32.totalorder %v640, 512
        %vm643 = vmand %vm641, %vm642
        %644 = vst.msk [vmem:[%s219] sm:$0xf] %vm643, %v638
        %s645 = sand.u32 %s138, 1
        %s646 = scalar_lea.sflag [#allocation4], %s645
        %s647 = sand.u32 %s138, 1
        %s648 = smul.addr %s647, 4
        %s649 = scalar_lea.vmem [#allocation3], %s648
        // Predicated region
        $region41: #{tpu_custom_call.1} parent=39 // pred_check
          %p650 = pneg %p148
        $region42: #{tpu_custom_call.1} parent=39 // pred_check_branch
          %652 = sbr.rel (%p650) target = $region44
        $region43: #{tpu_custom_call.1} parent=39 // pred_region
          %s653 = smul.u32 4, %s20
          %655 = vsyncadd %s646, 0
          %s656 = scalar_lea.hbm %s5, %s653
          %s658 = sshll.u32 %s649, 4
          %s659 = int_to_ptr.vmem [resolvable:$true] %s658
          %s660 = sshll.u32 %s656, 4
          %s661 = int_to_ptr.hbm [resolvable:$true] %s660
          %663 = dma.vmem_to_hbm [thread:$0]  %s659, 64, %s661, %s646
        $region44: #{tpu_custom_call.1} parent=39 // pred_fallthru
          _
      $region40: #{tpu_custom_call.1} parent=5 // pred_fallthru
        _
      %p664 = scmp.le.s32.totalorder 2, %s15
      // Predicated region
      $region45: #{tpu_custom_call.1} parent=5 // pred_check
        %p665 = pneg %p664
      $region46: #{tpu_custom_call.1} parent=5 // pred_check_branch
        %667 = sbr.rel (%p665) target = $region48
      $region47: #{tpu_custom_call.1} parent=5 // pred_region
        %s668 = ssub.s32 %s15, 2
        // Predicated region
        $region49: #{tpu_custom_call.1} parent=47 // pred_check
          %p669 = pneg %p154
        $region50: #{tpu_custom_call.1} parent=47 // pred_check_branch
          %671 = sbr.rel (%p669) target = $region52
        $region51: #{tpu_custom_call.1} parent=47 // pred_region
          %s672 = sand.u32 %s139, 1
          %s673 = scalar_lea.sflag [#allocation4], %s672
          %s674 = sand.u32 %s139, 1
          %s675 = smul.addr %s674, 4
          %s676 = scalar_lea.vmem [#allocation3], %s675
          %678 = dma.done %s673, 64
        $region52: #{tpu_custom_call.1} parent=47 // pred_fallthru
          _
      $region48: #{tpu_custom_call.1} parent=5 // pred_fallthru
        _
    $region6: #{tpu_custom_call.1} parent=1 // loop_footer
      %s19 = sadd.s32 1, %s15
    $region7: #{tpu_custom_call.1} parent=1 // loop_footer_branch
      %14 = sbr.rel target = $region3
    $region8: #{tpu_custom_call.1} parent=1 // loop_exit
      _
    %679 = vsyncpa [#allocation4], 1
    %s680 = scalar_lea.sflag [#allocation4], 1
    %681 = vsyncpa %s680, 1

</llo_original>
